<compile_context>
chip_gen: v5e
topology: v5e:2x2
jax: 0.10.0
libtpu: 0.0.40
codegen_flags: <defaults>
</compile_context>

<pallas_src>
import jax
import jax.numpy as jnp
from jax.experimental import pallas as pl
from jax.experimental.pallas import tpu as pltpu


def _seq_reparam_kernel(logits_ref, eps0_ref, eps1_ref,
                        w1_ref, b1_ref, w2_ref, b2_ref,
                        out_ref):
    """Fused forward: gaussian reparam -> dense MLP projection -> gaussian reparam.

    Writes a single lane-dense slab: out[:, 0:L0]        = z0
                                     out[:, L0:L0+2*L1]  = proj logits
                                     out[:, L0+2*L1:]    = z1
    """
    L0 = eps0_ref.shape[1]
    L1 = eps1_ref.shape[1]

    logits = logits_ref[...]                              # [TB, 2*L0]

    # --- reparameterizer 0 (isotropic gaussian) ---
    mu0 = logits[:, :L0]
    logvar0 = logits[:, L0:]
    z0 = mu0 + jnp.exp(0.5 * logvar0) * eps0_ref[...]     # [TB, L0]

    # --- inter-projection dense net (Linear -> ReLU -> Linear) ---
    h = jnp.dot(z0, w1_ref[...], preferred_element_type=jnp.float32) + b1_ref[...]
    h = jnp.maximum(h, 0.0)
    proj = jnp.dot(h, w2_ref[...], preferred_element_type=jnp.float32) + b2_ref[...]  # [TB, 2*L1]

    # --- reparameterizer 1 (isotropic gaussian) ---
    mu1 = proj[:, :L1]
    logvar1 = proj[:, L1:]
    z1 = mu1 + jnp.exp(0.5 * logvar1) * eps1_ref[...]     # [TB, L1]

    # Packed lane-dense output (single 128-wide HBM writeback per tile).
    out_ref[:, :L0] = z0
    out_ref[:, L0:L0 + 2 * L1] = proj
    out_ref[:, L0 + 2 * L1:] = z1


def _round_up(x, m):
    return ((x + m - 1) // m) * m


class SequentialReparameterizerPallas:
    """JAX/Pallas equivalent of the two-stage SequentialReparameterizer forward."""

    # Max rows per batch tile (sublane-aligned; big enough to amortize the
    # ~0.35us per-grid-step overhead, tiny in VMEM at these feature sizes).
    MAX_TB = 512

    def __init__(self, latent0=32, latent1=32, hidden=64, key=jax.random.PRNGKey(42)):
        self.latent0 = latent0
        self.latent1 = latent1
        self.hidden = hidden
        self.input_size = 2 * latent0
        self.output_size = latent1
        k1, k2, k3, k4 = jax.random.split(key, 4)
        # deterministic synthetic parameter init (no checkpoint load)
        self.w1 = (jax.random.normal(k1, (latent0, hidden), jnp.float32)
                   / jnp.sqrt(latent0))
        self.b1 = 0.01 * jax.random.normal(k2, (1, hidden), jnp.float32)
        self.w2 = (jax.random.normal(k3, (hidden, 2 * latent1), jnp.float32)
                   / jnp.sqrt(hidden))
        self.b2 = 0.01 * jax.random.normal(k4, (1, 2 * latent1), jnp.float32)

    def forward(self, logits, eps0, eps1):
        B = logits.shape[0]
        L0, L1, H = self.latent0, self.latent1, self.hidden
        out_width = L0 + 2 * L1 + L1                 # packed [z0 | proj | z1]
        original_logits = logits

        # Sublane-aligned batch tile; pad batch to a full number of tiles so
        # every block is an unmasked (8,128)-aligned tile.  Padded rows are
        # computed (zeros in -> finite out) and dropped on slicing below.
        TB = min(self.MAX_TB, _round_up(B, 8))
        Bp = _round_up(B, TB)
        if Bp != B:
            pad = Bp - B
            logits = jnp.pad(logits, ((0, pad), (0, 0)))
            eps0 = jnp.pad(eps0, ((0, pad), (0, 0)))
            eps1 = jnp.pad(eps1, ((0, pad), (0, 0)))

        act_map = lambda i: (i, 0)       # batch-tiled activations
        const_map = lambda i: (0, 0)     # weights/biases stay VMEM-resident

        packed = pl.pallas_call(
            _seq_reparam_kernel,
            out_shape=jax.ShapeDtypeStruct((Bp, out_width), jnp.float32),
            grid=(Bp // TB,),
            in_specs=[
                pl.BlockSpec((TB, 2 * L0), act_map),      # logits
                pl.BlockSpec((TB, L0), act_map),          # eps0
                pl.BlockSpec((TB, L1), act_map),          # eps1
                pl.BlockSpec((L0, H), const_map),         # w1
                pl.BlockSpec((1, H), const_map),          # b1
                pl.BlockSpec((H, 2 * L1), const_map),     # w2
                pl.BlockSpec((1, 2 * L1), const_map),     # b2
            ],
            out_specs=pl.BlockSpec((TB, out_width), act_map),
            compiler_params=pltpu.CompilerParams(
                dimension_semantics=("parallel",)),       # v7x dual-TC sharding
        )(logits, eps0, eps1, self.w1, self.b1, self.w2, self.b2)

        # Unpack (and drop padded rows).
        z0 = packed[:B, :L0]
        proj = packed[:B, L0:L0 + 2 * L1]
        z1 = packed[:B, L0 + 2 * L1:]

        # mu/logvar are pure slices of existing arrays -- no extra kernel I/O.
        params_list = [
            {'mu': original_logits[:, :L0],
             'logvar': original_logits[:, L0:],
             'logits': z0},
            {'mu': proj[:, :L1],
             'logvar': proj[:, L1:],
             'logits': z1},
        ]
        return z1, {'logits': original_logits, 'sequential': params_list}


def _reference_forward(model, logits, eps0, eps1):
    """Pure-JAX reference for correctness checking."""
    L0, L1 = model.latent0, model.latent1
    mu0, logvar0 = logits[:, :L0], logits[:, L0:]
    z0 = mu0 + jnp.exp(0.5 * logvar0) * eps0
    h = jnp.maximum(z0 @ model.w1 + model.b1, 0.0)
    proj = h @ model.w2 + model.b2
    mu1, logvar1 = proj[:, :L1], proj[:, L1:]
    z1 = mu1 + jnp.exp(0.5 * logvar1) * eps1
    return z1, z0, proj


def _check(model, B, key):
    L0, L1 = model.latent0, model.latent1
    k_logits, k_eps0, k_eps1 = jax.random.split(key, 3)
    logits = jax.random.normal(k_logits, (B, 2 * L0), jnp.float32)
    eps0 = jax.random.normal(k_eps0, (B, L0), jnp.float32)
    eps1 = jax.random.normal(k_eps1, (B, L1), jnp.float32)

    z_final, params = model.forward(logits, eps0, eps1)
    jax.block_until_ready(z_final)

    z1_ref, z0_ref, proj_ref = _reference_forward(model, logits, eps0, eps1)
    assert z_final.shape == (B, L1)
    assert params['logits'].shape == (B, 2 * L0)
    assert jnp.allclose(z_final, z1_ref, atol=1e-5, rtol=1e-5)
    assert jnp.allclose(params['sequential'][0]['logits'], z0_ref, atol=1e-5, rtol=1e-5)
    assert jnp.allclose(params['sequential'][0]['mu'], logits[:, :L0], atol=1e-5, rtol=1e-5)
    assert jnp.allclose(params['sequential'][0]['logvar'], logits[:, L0:], atol=1e-5, rtol=1e-5)
    assert jnp.allclose(params['sequential'][1]['mu'], proj_ref[:, :L1], atol=1e-5, rtol=1e-5)
    assert jnp.allclose(params['sequential'][1]['logvar'], proj_ref[:, L1:], atol=1e-5, rtol=1e-5)


if __name__ == "__main__":
    L0, L1, H = 32, 32, 64
    key = jax.random.PRNGKey(0)
    k_data, k_data2, k_params = jax.random.split(key, 3)

    model = SequentialReparameterizerPallas(latent0=L0, latent1=L1, hidden=H,
                                            key=k_params)

    # small batch (non-multiple-of-8 -> exercises the sublane padding path)
    _check(model, B=2, key=k_data)
    # second non-multiple-of-8 batch to re-validate padded-row handling
    _check(model, B=10, key=k_data2)

    print("KERNEL_OK")
</pallas_src>

<mosaic_0001>
module attributes {stable_mosaic.version = 11 : i64} {
  func.func @_seq_reparam_kernel(%arg0: i32, %arg1: memref<8x64xf32, #tpu.memory_space<vmem>>, %arg2: memref<8x32xf32, #tpu.memory_space<vmem>>, %arg3: memref<8x32xf32, #tpu.memory_space<vmem>>, %arg4: memref<32x64xf32, #tpu.memory_space<vmem>>, %arg5: memref<1x64xf32, #tpu.memory_space<vmem>>, %arg6: memref<64x64xf32, #tpu.memory_space<vmem>>, %arg7: memref<1x64xf32, #tpu.memory_space<vmem>>, %arg8: memref<8x128xf32, #tpu.memory_space<vmem>>) attributes {dimension_semantics = [#tpu.dimension_semantics<parallel>], iteration_bounds = array<i64: 1>, scalar_prefetch = 0 : i64, scratch_operands = 0 : i64, tpu.core_type = #tpu.core_type<tc>, window_params = [{transform_indices = @transform_0, window_bounds = array<i64: 8, 64>}, {transform_indices = @transform_1, window_bounds = array<i64: 8, 32>}, {transform_indices = @transform_2, window_bounds = array<i64: 8, 32>}, {pipeline_mode = #tpu.pipeline_mode<synchronous>, transform_indices = @transform_3, window_bounds = array<i64: 32, 64>}, {pipeline_mode = #tpu.pipeline_mode<synchronous>, transform_indices = @transform_4, window_bounds = array<i64: 1, 64>}, {pipeline_mode = #tpu.pipeline_mode<synchronous>, transform_indices = @transform_5, window_bounds = array<i64: 64, 64>}, {pipeline_mode = #tpu.pipeline_mode<synchronous>, transform_indices = @transform_6, window_bounds = array<i64: 1, 64>}, {transform_indices = @transform_7, window_bounds = array<i64: 8, 128>}]} {
    %c0 = arith.constant 0 : index
    %c0_0 = arith.constant 0 : index
    %0 = vector.load %arg1[%c0, %c0_0] : memref<8x64xf32, #tpu.memory_space<vmem>>, vector<8x64xf32>
    %1 = vector.extract_strided_slice %0 {offsets = [0, 0], sizes = [8, 32], strides = [1, 1]} : vector<8x64xf32> to vector<8x32xf32>
    %2 = vector.extract_strided_slice %0 {offsets = [0, 32], sizes = [8, 32], strides = [1, 1]} : vector<8x64xf32> to vector<8x32xf32>
    %cst = arith.constant 5.000000e-01 : f32
    %3 = vector.broadcast %cst : f32 to vector<8x32xf32>
    %4 = arith.mulf %3, %2 : vector<8x32xf32>
    %5 = math.exp %4 : vector<8x32xf32>
    %c0_1 = arith.constant 0 : index
    %c0_2 = arith.constant 0 : index
    %6 = vector.load %arg2[%c0_1, %c0_2] : memref<8x32xf32, #tpu.memory_space<vmem>>, vector<8x32xf32>
    %7 = arith.mulf %5, %6 : vector<8x32xf32>
    %8 = arith.addf %1, %7 : vector<8x32xf32>
    %c0_3 = arith.constant 0 : index
    %c0_4 = arith.constant 0 : index
    %9 = vector.load %arg4[%c0_3, %c0_4] : memref<32x64xf32, #tpu.memory_space<vmem>>, vector<32x64xf32>
    %cst_5 = arith.constant dense<0.000000e+00> : vector<8x64xf32>
    %10 = tpu.matmul %8, %9, %cst_5 {dimension_numbers = #tpu.dot_dimension_numbers<[1], [0], [0], [1], [0, 0, 1, 1], [], []>} : vector<8x32xf32>, vector<32x64xf32>, vector<8x64xf32> -> vector<8x64xf32>
    %c0_6 = arith.constant 0 : index
    %c0_7 = arith.constant 0 : index
    %11 = vector.load %arg5[%c0_6, %c0_7] : memref<1x64xf32, #tpu.memory_space<vmem>>, vector<1x64xf32>
    %12 = vector.broadcast %11 : vector<1x64xf32> to vector<8x64xf32>
    %13 = arith.addf %10, %12 : vector<8x64xf32>
    %cst_8 = arith.constant 0.000000e+00 : f32
    %14 = vector.broadcast %cst_8 : f32 to vector<8x64xf32>
    %15 = arith.maximumf %13, %14 : vector<8x64xf32>
    %c0_9 = arith.constant 0 : index
    %c0_10 = arith.constant 0 : index
    %16 = vector.load %arg6[%c0_9, %c0_10] : memref<64x64xf32, #tpu.memory_space<vmem>>, vector<64x64xf32>
    %cst_11 = arith.constant dense<0.000000e+00> : vector<8x64xf32>
    %17 = tpu.matmul %15, %16, %cst_11 {dimension_numbers = #tpu.dot_dimension_numbers<[1], [0], [0], [1], [0, 0, 1, 1], [], []>} : vector<8x64xf32>, vector<64x64xf32>, vector<8x64xf32> -> vector<8x64xf32>
    %c0_12 = arith.constant 0 : index
    %c0_13 = arith.constant 0 : index
    %18 = vector.load %arg7[%c0_12, %c0_13] : memref<1x64xf32, #tpu.memory_space<vmem>>, vector<1x64xf32>
    %19 = vector.broadcast %18 : vector<1x64xf32> to vector<8x64xf32>
    %20 = arith.addf %17, %19 : vector<8x64xf32>
    %21 = vector.extract_strided_slice %20 {offsets = [0, 0], sizes = [8, 32], strides = [1, 1]} : vector<8x64xf32> to vector<8x32xf32>
    %22 = vector.extract_strided_slice %20 {offsets = [0, 32], sizes = [8, 32], strides = [1, 1]} : vector<8x64xf32> to vector<8x32xf32>
    %cst_14 = arith.constant 5.000000e-01 : f32
    %23 = vector.broadcast %cst_14 : f32 to vector<8x32xf32>
    %24 = arith.mulf %23, %22 : vector<8x32xf32>
    %25 = math.exp %24 : vector<8x32xf32>
    %c0_15 = arith.constant 0 : index
    %c0_16 = arith.constant 0 : index
    %26 = vector.load %arg3[%c0_15, %c0_16] : memref<8x32xf32, #tpu.memory_space<vmem>>, vector<8x32xf32>
    %27 = arith.mulf %25, %26 : vector<8x32xf32>
    %28 = arith.addf %21, %27 : vector<8x32xf32>
    %c0_17 = arith.constant 0 : index
    %c0_18 = arith.constant 0 : index
    %29 = vector.load %arg8[%c0_17, %c0_18] : memref<8x128xf32, #tpu.memory_space<vmem>>, vector<8x32xf32>
    tpu.vector_store %arg8[%c0_17, %c0_18], %8 {strides = array<i32>} : memref<8x128xf32, #tpu.memory_space<vmem>>, vector<8x32xf32>,
    %c0_19 = arith.constant 0 : index
    %c32 = arith.constant 32 : index
    %30 = vector.load %arg8[%c0_19, %c32] : memref<8x128xf32, #tpu.memory_space<vmem>>, vector<8x64xf32>
    tpu.vector_store %arg8[%c0_19, %c32], %20 {strides = array<i32>} : memref<8x128xf32, #tpu.memory_space<vmem>>, vector<8x64xf32>,
    %c0_20 = arith.constant 0 : index
    %c96 = arith.constant 96 : index
    %31 = vector.load %arg8[%c0_20, %c96] : memref<8x128xf32, #tpu.memory_space<vmem>>, vector<8x32xf32>
    tpu.vector_store %arg8[%c0_20, %c96], %28 {strides = array<i32>} : memref<8x128xf32, #tpu.memory_space<vmem>>, vector<8x32xf32>,
    return
  }
  func.func @transform_0(%arg0: i32) -> (i32, i32) {
    %c0_i32 = arith.constant 0 : i32
    %c0_i32_0 = arith.constant 0 : i32
    return %arg0, %c0_i32 : i32, i32
  }
  func.func @transform_1(%arg0: i32) -> (i32, i32) {
    %c0_i32 = arith.constant 0 : i32
    %c0_i32_0 = arith.constant 0 : i32
    return %arg0, %c0_i32 : i32, i32
  }
  func.func @transform_2(%arg0: i32) -> (i32, i32) {
    %c0_i32 = arith.constant 0 : i32
    %c0_i32_0 = arith.constant 0 : i32
    return %arg0, %c0_i32 : i32, i32
  }
  func.func @transform_3(%arg0: i32) -> (i32, i32) {
    %c0_i32 = arith.constant 0 : i32
    %c0_i32_0 = arith.constant 0 : i32
    %c0_i32_1 = arith.constant 0 : i32
    return %c0_i32, %c0_i32_0 : i32, i32
  }
  func.func @transform_4(%arg0: i32) -> (i32, i32) {
    %c0_i32 = arith.constant 0 : i32
    %c0_i32_0 = arith.constant 0 : i32
    %c0_i32_1 = arith.constant 0 : i32
    return %c0_i32, %c0_i32_0 : i32, i32
  }
  func.func @transform_5(%arg0: i32) -> (i32, i32) {
    %c0_i32 = arith.constant 0 : i32
    %c0_i32_0 = arith.constant 0 : i32
    %c0_i32_1 = arith.constant 0 : i32
    return %c0_i32, %c0_i32_0 : i32, i32
  }
  func.func @transform_6(%arg0: i32) -> (i32, i32) {
    %c0_i32 = arith.constant 0 : i32
    %c0_i32_0 = arith.constant 0 : i32
    %c0_i32_1 = arith.constant 0 : i32
    return %c0_i32, %c0_i32_0 : i32, i32
  }
  func.func @transform_7(%arg0: i32) -> (i32, i32) {
    %c0_i32 = arith.constant 0 : i32
    %c0_i32_0 = arith.constant 0 : i32
    return %arg0, %c0_i32 : i32, i32
  }
}

</mosaic_0001>

<llo_original>
// kernel: tpu_custom_call.1
$region0: #{tpu_custom_call.1}
  #allocation0 [shape = 'u32[]', space=smem, size = 0x4, offset = 0x4, fixed_abs, tag = 'smem constant byte address 0x4 - core index']
  #allocation1 [shape = 'u32[72,128]{1,0:T(1,128)}', space=vmem, size = 0x9000, scoped, tag = 'internal scratch']
  %s0 = inlined_call_operand.hbm [shape: f32[8,64], index: 0, kind: input, shape index: {}]
  %s1 = inlined_call_operand.hbm [shape: f32[8,32], index: 1, kind: input, shape index: {}]
  %s2 = inlined_call_operand.hbm [shape: f32[8,32], index: 2, kind: input, shape index: {}]
  %s3 = inlined_call_operand.hbm [shape: f32[32,64], index: 3, kind: input, shape index: {}]
  %s4 = inlined_call_operand.vmem [shape: f32[1,64], index: 4, kind: input, shape index: {}]
  %s5 = inlined_call_operand.hbm [shape: f32[64,64], index: 5, kind: input, shape index: {}]
  %s6 = inlined_call_operand.vmem [shape: f32[1,64], index: 6, kind: input, shape index: {}]
  %s7 = inlined_call_operand.hbm [shape: f32[8,128], index: 7, kind: output, shape index: {}]
  %s8 = sld [smem:[#allocation0]]
  $region58: #{tpu_custom_call.1} parent=0
    _
  %s10 = ssub.s32 1, %s8
  %s11 = scalar_select 0, %s10, %s8
  $region1: #{tpu_custom_call.1} parent=0
    #allocation2 [shape = 'u8[4096]{0}', space=vmem, size = 0x1000, scoped, tag = 'input window, operand 0, single buffered']
    #allocation3 [shape = 's32[1]{0}', space=sflag, size = 0x4, scoped, tag = 'scoped memory for tpu_custom_call.1']
    #allocation4 [shape = 's32[1]{0}', space=sflag, size = 0x4, scoped, tag = 'scoped memory for tpu_custom_call.1']
    #allocation5 [shape = 'u8[4096]{0}', space=vmem, size = 0x1000, scoped, tag = 'input window, operand 1, single buffered']
    #allocation6 [shape = 's32[1]{0}', space=sflag, size = 0x4, scoped, tag = 'scoped memory for tpu_custom_call.1']
    #allocation7 [shape = 'u8[4096]{0}', space=vmem, size = 0x1000, scoped, tag = 'input window, operand 2, single buffered']
    #allocation8 [shape = 'u8[16384]{0}', space=vmem, size = 0x4000, scoped, tag = 'input window, operand 3, single buffered']
    #allocation9 [shape = 's32[1]{0}', space=sflag, size = 0x4, scoped, tag = 'scoped memory for tpu_custom_call.1']
    #allocation10 [shape = 'u8[32768]{0}', space=vmem, size = 0x8000, scoped, tag = 'input window, operand 5, single buffered']
    #allocation11 [shape = 'u8[4096]{0}', space=vmem, size = 0x1000, scoped, tag = 'output window, operand 0, single buffered']
    %12 = vsyncpa [#allocation3], 0
    %13 = vsyncpa [#allocation6], 0
    %14 = vsyncpa [#allocation9], 0
    %15 = vsyncpa [#allocation4], 0
    // Predicated region
    $region2: #{tpu_custom_call.1} parent=1 // pred_check
      _
    $region3: #{tpu_custom_call.1} parent=1 // pred_check_branch
      %17 = sbr.rel (0) target = $region5
    $region4: #{tpu_custom_call.1} parent=1 // pred_region
      %19 = vsyncadd [#allocation3], 0
      %s21 = sshll.u32 %s0, 4
      %s22 = int_to_ptr.hbm [resolvable:$true] %s21
      %s23 = sshll.u32 [#allocation2], 4
      %s24 = int_to_ptr.vmem [resolvable:$true] %s23
      %26 = dma.hbm_to_vmem [thread:$0]  %s22, 128, %s24, [#allocation3]
    $region5: #{tpu_custom_call.1} parent=1 // pred_fallthru
      _
    // Predicated region
    $region6: #{tpu_custom_call.1} parent=1 // pred_check
      _
    $region7: #{tpu_custom_call.1} parent=1 // pred_check_branch
      %28 = sbr.rel (0) target = $region9
    $region8: #{tpu_custom_call.1} parent=1 // pred_region
      %30 = vsyncadd [#allocation6], 0
      %s32 = sshll.u32 %s1, 4
      %s33 = int_to_ptr.hbm [resolvable:$true] %s32
      %s34 = sshll.u32 [#allocation5], 4
      %s35 = int_to_ptr.vmem [resolvable:$true] %s34
      %37 = dma.hbm_to_vmem [thread:$0]  %s33, 128, %s35, [#allocation6]
    $region9: #{tpu_custom_call.1} parent=1 // pred_fallthru
      _
    // Predicated region
    $region10: #{tpu_custom_call.1} parent=1 // pred_check
      _
    $region11: #{tpu_custom_call.1} parent=1 // pred_check_branch
      %39 = sbr.rel (0) target = $region13
    $region12: #{tpu_custom_call.1} parent=1 // pred_region
      %41 = vsyncadd [#allocation6], 0
      %s43 = sshll.u32 %s2, 4
      %s44 = int_to_ptr.hbm [resolvable:$true] %s43
      %s45 = sshll.u32 [#allocation7], 4
      %s46 = int_to_ptr.vmem [resolvable:$true] %s45
      %48 = dma.hbm_to_vmem [thread:$0]  %s44, 128, %s46, [#allocation6]
    $region13: #{tpu_custom_call.1} parent=1 // pred_fallthru
      _
    // Predicated region
    $region14: #{tpu_custom_call.1} parent=1 // pred_check
      _
    $region15: #{tpu_custom_call.1} parent=1 // pred_check_branch
      %50 = sbr.rel (0) target = $region17
    $region16: #{tpu_custom_call.1} parent=1 // pred_region
      %52 = vsyncadd [#allocation9], 0
      %s53 = sshll.u32 %s3, 4
      %s54 = int_to_ptr.hbm [resolvable:$true] %s53
      %s55 = sshll.u32 [#allocation8], 4
      %s56 = int_to_ptr.vmem [resolvable:$true] %s55
      %61 = dma.hbm_to_vmem [thread:$0]  %s54, 512, %s56, [#allocation9], 128, 128, 8
    $region17: #{tpu_custom_call.1} parent=1 // pred_fallthru
      _
    // Predicated region
    $region18: #{tpu_custom_call.1} parent=1 // pred_check
      _
    $region19: #{tpu_custom_call.1} parent=1 // pred_check_branch
      %63 = sbr.rel (0) target = $region21
    $region20: #{tpu_custom_call.1} parent=1 // pred_region
      _
    $region21: #{tpu_custom_call.1} parent=1 // pred_fallthru
      _
    // Predicated region
    $region22: #{tpu_custom_call.1} parent=1 // pred_check
      _
    $region23: #{tpu_custom_call.1} parent=1 // pred_check_branch
      %65 = sbr.rel (0) target = $region25
    $region24: #{tpu_custom_call.1} parent=1 // pred_region
      %67 = vsyncadd [#allocation9], 0
      %s68 = sshll.u32 %s5, 4
      %s69 = int_to_ptr.hbm [resolvable:$true] %s68
      %s70 = sshll.u32 [#allocation10], 4
      %s71 = int_to_ptr.vmem [resolvable:$true] %s70
      %76 = dma.hbm_to_vmem [thread:$0]  %s69, 1024, %s71, [#allocation9], 128, 128, 8
    $region25: #{tpu_custom_call.1} parent=1 // pred_fallthru
      _
    // Predicated region
    $region26: #{tpu_custom_call.1} parent=1 // pred_check
      _
    $region27: #{tpu_custom_call.1} parent=1 // pred_check_branch
      %78 = sbr.rel (0) target = $region29
    $region28: #{tpu_custom_call.1} parent=1 // pred_region
      _
    $region29: #{tpu_custom_call.1} parent=1 // pred_fallthru
      _
    // Predicated region
    $region30: #{tpu_custom_call.1} parent=1 // pred_check
      _
    $region31: #{tpu_custom_call.1} parent=1 // pred_check_branch
      %80 = sbr.rel (0) target = $region33
    $region32: #{tpu_custom_call.1} parent=1 // pred_region
      %82 = dma.done [#allocation3], 128
    $region33: #{tpu_custom_call.1} parent=1 // pred_fallthru
      _
    // Predicated region
    $region34: #{tpu_custom_call.1} parent=1 // pred_check
      _
    $region35: #{tpu_custom_call.1} parent=1 // pred_check_branch
      %84 = sbr.rel (0) target = $region37
    $region36: #{tpu_custom_call.1} parent=1 // pred_region
      %86 = dma.done [#allocation6], 128
    $region37: #{tpu_custom_call.1} parent=1 // pred_fallthru
      _
    // Predicated region
    $region38: #{tpu_custom_call.1} parent=1 // pred_check
      _
    $region39: #{tpu_custom_call.1} parent=1 // pred_check_branch
      %88 = sbr.rel (0) target = $region41
    $region40: #{tpu_custom_call.1} parent=1 // pred_region
      %90 = dma.done [#allocation6], 128
    $region41: #{tpu_custom_call.1} parent=1 // pred_fallthru
      _
    // Predicated region
    $region42: #{tpu_custom_call.1} parent=1 // pred_check
      _
    $region43: #{tpu_custom_call.1} parent=1 // pred_check_branch
      %92 = sbr.rel (0) target = $region45
    $region44: #{tpu_custom_call.1} parent=1 // pred_region
      %94 = dma.done [#allocation9], 512
    $region45: #{tpu_custom_call.1} parent=1 // pred_fallthru
      _
    // Predicated region
    $region46: #{tpu_custom_call.1} parent=1 // pred_check
      _
    $region47: #{tpu_custom_call.1} parent=1 // pred_check_branch
      %96 = sbr.rel (0) target = $region49
    $region48: #{tpu_custom_call.1} parent=1 // pred_region
      %98 = dma.done [#allocation9], 1024
    $region49: #{tpu_custom_call.1} parent=1 // pred_fallthru
      _
    %v99 = vld [vmem:[#allocation2] sm:$0xff]
    %v100 = vmul.f32 %v99, 0.5
    %v101 = vmul.f32 %v100, 1.442695
    %v102 = vpow.pop %v101
    %v103 = vld [vmem:[#allocation5] sm:$0xff]
    %105 = vrot.lane.b32.xlu0 %v103, 32
    %v106 = vpop.permute.xlu0 %105
    %v108 = vmul.f32 %v102, %v106
    %110 = vrot.lane.b32.xlu0 %v108, 96
    %v111 = vpop.permute.xlu0 %110
    %v113 = vadd.f32 %v99, %v111
    %v114 = vld [vmem:[#allocation8] sm:$0xff]
    %v115 = vld [vmem:[#allocation8 + $0x8] sm:$0xff]
    %v116 = vld [vmem:[#allocation8 + $0x10] sm:$0xff]
    %v117 = vld [vmem:[#allocation8 + $0x18] sm:$0xff]
    %v118 = vld [vmem:[%s4] sm:$0x1]
    %v120 = vperm.slane %v118, 0
    %vm122 = vcmask 261120
    %v124 = vsel %vm122, %v113, 0
    %126 = vmatpush.msra.mxu0 0.0
    %127 = vmatpush.msra.mxu0 0.0
    %128 = vmatpush.msra.mxu0 0.0
    %129 = vmatpush.msra.mxu0 0.0
    %130 = vmatpush.msra.mxu0 0.0
    %131 = vmatpush.msra.mxu0 0.0
    %132 = vmatpush.msra.mxu0 0.0
    %133 = vmatpush.msra.mxu0 0.0
    %134 = vmatpush.msra.mxu0 0.0
    %135 = vmatpush.msra.mxu0 0.0
    %136 = vmatpush.msra.mxu0 0.0
    %137 = vmatpush.msra.mxu0 0.0
    %138 = vmatpush.msra.mxu0 %v117
    %139 = vmatpush.msra.mxu0 %v116
    %140 = vmatpush.msra.mxu0 %v115
    %141 = vmatpush.msra.mxu0 %v114
    %142 = vmatmul.f32.gmra.mxu0 %v124
    %v143 = vpop.f32.mrf.mxu0
    %v144 = vadd.f32 %v120, %v143
    %145 = vdwg.mxu0
    %v146 = vmax.f32 %v144, 0.0
    %v147 = vld [vmem:[#allocation10] sm:$0xff]
    %v148 = vld [vmem:[#allocation10 + $0x8] sm:$0xff]
    %v149 = vld [vmem:[#allocation10 + $0x10] sm:$0xff]
    %v150 = vld [vmem:[#allocation10 + $0x18] sm:$0xff]
    %v151 = vld [vmem:[#allocation10 + $0x20] sm:$0xff]
    %v152 = vld [vmem:[#allocation10 + $0x28] sm:$0xff]
    %v153 = vld [vmem:[#allocation10 + $0x30] sm:$0xff]
    %v154 = vld [vmem:[#allocation10 + $0x38] sm:$0xff]
    %v155 = vld [vmem:[%s6] sm:$0x1]
    %v157 = vperm.slane %v155, 0
    %vm159 = vcmask 523264
    %v161 = vsel %vm159, %v146, 0
    %163 = vmatpush.msra.mxu0 0.0
    %164 = vmatpush.msra.mxu0 0.0
    %165 = vmatpush.msra.mxu0 0.0
    %166 = vmatpush.msra.mxu0 0.0
    %167 = vmatpush.msra.mxu0 0.0
    %168 = vmatpush.msra.mxu0 0.0
    %169 = vmatpush.msra.mxu0 0.0
    %170 = vmatpush.msra.mxu0 0.0
    %171 = vmatpush.msra.mxu0 %v154
    %172 = vmatpush.msra.mxu0 %v153
    %173 = vmatpush.msra.mxu0 %v152
    %174 = vmatpush.msra.mxu0 %v151
    %175 = vmatpush.msra.mxu0 %v150
    %176 = vmatpush.msra.mxu0 %v149
    %177 = vmatpush.msra.mxu0 %v148
    %178 = vmatpush.msra.mxu0 %v147
    %179 = vmatmul.f32.gmra.mxu0 %v161
    %v180 = vpop.f32.mrf.mxu0
    %v181 = vadd.f32 %v157, %v180
    %182 = vdwg.mxu0
    %v183 = vmul.f32 %v181, 0.5
    %v184 = vmul.f32 %v183, 1.442695
    %v185 = vpow.pop %v184
    %v186 = vld [vmem:[#allocation7] sm:$0xff]
    %188 = vrot.lane.b32.xlu0 %v186, 32
    %v189 = vpop.permute.xlu0 %188
    %v191 = vmul.f32 %v185, %v189
    %193 = vrot.lane.b32.xlu0 %v191, 96
    %v194 = vpop.permute.xlu0 %193
    %v196 = vadd.f32 %v181, %v194
    %197 = vst.msk [vmem:[#allocation11] sm:$0xff] %vm122, %v113
    %199 = vrot.lane.b32.xlu0 %v181, 32
    %v200 = vpop.permute.xlu0 %199
    %vm202 = vcmask 785664
    %203 = vst.msk [vmem:[#allocation11] sm:$0xff] %vm202, %v200
    %205 = vrot.lane.b32.xlu0 %v196, 96
    %v206 = vpop.permute.xlu0 %205
    %vm208 = vcmask 1048320
    %209 = vst.msk [vmem:[#allocation11] sm:$0xff] %vm208, %v206
    // Predicated region
    $region50: #{tpu_custom_call.1} parent=1 // pred_check
      _
    $region51: #{tpu_custom_call.1} parent=1 // pred_check_branch
      %211 = sbr.rel (0) target = $region53
    $region52: #{tpu_custom_call.1} parent=1 // pred_region
      %213 = vsyncadd [#allocation4], 0
      %s215 = sshll.u32 [#allocation11], 4
      %s216 = int_to_ptr.vmem [resolvable:$true] %s215
      %s217 = sshll.u32 %s7, 4
      %s218 = int_to_ptr.hbm [resolvable:$true] %s217
      %220 = dma.vmem_to_hbm [thread:$0]  %s216, 128, %s218, [#allocation4]
    $region53: #{tpu_custom_call.1} parent=1 // pred_fallthru
      _
    // Predicated region
    $region54: #{tpu_custom_call.1} parent=1 // pred_check
      _
    $region55: #{tpu_custom_call.1} parent=1 // pred_check_branch
      %222 = sbr.rel (0) target = $region57
    $region56: #{tpu_custom_call.1} parent=1 // pred_region
      %224 = dma.done [#allocation4], 128
    $region57: #{tpu_custom_call.1} parent=1 // pred_fallthru
      _
    %225 = vsyncpa [#allocation3], 1
    %226 = vsyncpa [#allocation6], 1
    %227 = vsyncpa [#allocation9], 1
    %228 = vsyncpa [#allocation4], 1

</llo_original>
